<compile_context>
chip_gen: v5e
topology: v5e:2x2
jax: 0.10.0
libtpu: 0.0.40
codegen_flags: <defaults>
</compile_context>

<pallas_src>
import functools

import jax
import jax.numpy as jnp
import numpy as np
from jax import lax
from jax.experimental import pallas as pl
from jax.experimental.pallas import tpu as pltpu

# ---- model hyperparameters (consistent with the PyTorch module) ----
N_EMBED = 32      # config.N_EMBED
BLOCK_SIZE = 8    # config.BLOCK_SIZE == T
N_HEADS = 4
HEAD_SIZE = 8     # n_heads * head_size == N_EMBED
BATCH = 2


def _mha_kernel(x_ref, wqkv_ref, wp_ref, bp_ref, mask_ref, o_ref,
                *, n_heads, head_size, lane_groups):
    H, D = n_heads, head_size
    BT, C = x_ref.shape

    x = x_ref[...]                                            # (BT, C)
    # One leading-axis broadcast, done once (not inside any loop).
    xh = jnp.broadcast_to(x[None, :, :], (H, BT, C))          # (H, BT, C)

    # Fused per-head QKV projection: ONE batched MXU matmul.
    # wqkv_ref[h] = [Wq_h * D^-0.5 | Wk_h | Wv_h]  (scale folded at init).
    qkv = jnp.einsum('hbc,hcf->hbf', xh, wqkv_ref[...],
                     preferred_element_type=jnp.float32)      # (H, BT, 3D)
    q = qkv[..., 0 * D:1 * D]
    k = qkv[..., 1 * D:2 * D]
    v = qkv[..., 2 * D:3 * D]

    # Per-head scores (already scaled) + precomputed additive mask
    # (causal within a sequence, -1e30 across different batch elements).
    s = jnp.einsum('hqd,hkd->hqk', q, k,
                   preferred_element_type=jnp.float32)        # (H, BT, BT)
    s = s + mask_ref[...]                                     # (BT, BT) bcast over H

    # Numerically-stable softmax; exact normalization (no approx reciprocal).
    m = jnp.max(s, axis=-1, keepdims=True)
    e = jnp.exp(s - m)
    denom = jnp.sum(e, axis=-1, keepdims=True)

    pv = jnp.einsum('hqk,hkd->hqd', e, v,
                    preferred_element_type=jnp.float32)       # (H, BT, D)
    pv = pv / denom

    # Output projection folded over heads: sum_h pv_h @ Wp_h  (+ bias).
    per_head = jnp.einsum('hqd,hdc->hqc', pv, wp_ref[...],
                          preferred_element_type=jnp.float32) # (H, BT, C)
    out = jnp.sum(per_head, axis=0) + bp_ref[...]             # (BT, C)

    # Lane-dense store: pack `lane_groups` sublane groups side by side so the
    # final store is an unmasked, full-128-lane vst.  The wrapper inverts this
    # static permutation in XLA.
    if lane_groups > 1:
        rows = BT // lane_groups
        out = jnp.concatenate(
            [out[g * rows:(g + 1) * rows, :] for g in range(lane_groups)],
            axis=1)                                           # (rows, lane_groups*C)
    o_ref[...] = out.astype(o_ref.dtype)


def prepare_mha_params(wq, wk, wv, wp, bp, *, n_heads, head_size, batch, seq_len):
    """One-time parameter prep (hoisted out of the per-call forward path).

    Returns (wqkv, wp3, bp2, mask):
      wqkv: (H, C, 3*D)   per-head [Wq * D^-0.5 | Wk | Wv]
      wp3:  (H, D, C)     per-head slice of the output projection
      bp2:  (1, C)
      mask: (B*T, B*T)    additive 0 / -1e30 causal + same-batch-block mask
    """
    C = wq.shape[0]
    H, D = n_heads, head_size
    scale = float(D) ** -0.5

    wq3 = (wq * scale).reshape(C, H, D).transpose(1, 0, 2)    # (H, C, D)
    wk3 = wk.reshape(C, H, D).transpose(1, 0, 2)
    wv3 = wv.reshape(C, H, D).transpose(1, 0, 2)
    wqkv = jnp.concatenate([wq3, wk3, wv3], axis=-1)          # (H, C, 3D)

    wp3 = wp.reshape(H, D, C)                                 # (H, D, C)
    bp2 = bp.reshape(1, C)

    bt = batch * seq_len
    r = np.arange(bt)[:, None]
    c = np.arange(bt)[None, :]
    keep = ((r // seq_len) == (c // seq_len)) & ((r % seq_len) >= (c % seq_len))
    mask = jnp.asarray(np.where(keep, 0.0, -1e30), dtype=jnp.float32)
    return wqkv, wp3, bp2, mask


def multi_head_attention(x, params, *, n_heads, head_size):
    """x: (B, T, C); params from prepare_mha_params."""
    wqkv, wp3, bp2, mask = params
    B, T, C = x.shape
    BT = B * T
    x2 = x.reshape(BT, C)

    # Lane-dense output layout: (BT, C) -> (BT/G, G*C) with G*C == 128 lanes.
    if C <= 128 and 128 % C == 0 and BT % (128 // C) == 0:
        lane_groups = 128 // C
    else:
        lane_groups = 1
    rows = BT // lane_groups

    kernel = functools.partial(_mha_kernel, n_heads=n_heads,
                               head_size=head_size, lane_groups=lane_groups)

    # Single grid step (empty grid): the whole problem is a few KiB of VMEM, so
    # per-grid-step overhead (~0.35 us/step) would dominate any tiled version.
    # TODO(synk): for realistic sizes (T >= 128, C >= 256) switch to bf16 MXU
    # operands with f32 accumulation, flash-style tiling over T, and a
    # "parallel" batch/head grid axis so both v7x TensorCores are used; size
    # tiles against v7x's 64 MiB VMEM (32 MiB default scoped limit).
    out = pl.pallas_call(
        kernel,
        out_shape=jax.ShapeDtypeStruct((rows, lane_groups * C), x.dtype),
        in_specs=[pl.BlockSpec(memory_space=pltpu.MemorySpace.VMEM)] * 5,
        out_specs=pl.BlockSpec(memory_space=pltpu.MemorySpace.VMEM),
    )(x2, wqkv, wp3, bp2, mask)

    if lane_groups > 1:
        out = out.reshape(rows, lane_groups, C).transpose(1, 0, 2)
    return out.reshape(B, T, C)


def _reference(x, wq, wk, wv, wp, bp, *, n_heads, head_size):
    # Pure-JAX reference mirroring the PyTorch forward (highest-precision dots
    # so the comparison against the f32 kernel is meaningful).
    hp = lax.Precision.HIGHEST
    q = jnp.matmul(x, wq, precision=hp)
    k = jnp.matmul(x, wk, precision=hp)
    v = jnp.matmul(x, wv, precision=hp)
    T = x.shape[1]
    tril = jnp.tril(jnp.ones((T, T), dtype=bool))
    outs = []
    for h in range(n_heads):
        sl = slice(h * head_size, (h + 1) * head_size)
        s = jnp.matmul(q[..., sl], jnp.swapaxes(k[..., sl], -2, -1), precision=hp)
        s = s * (head_size ** -0.5)
        s = jnp.where(tril, s, -jnp.inf)
        w = jax.nn.softmax(s, axis=-1)
        outs.append(jnp.matmul(w, v[..., sl], precision=hp))
    cat = jnp.concatenate(outs, axis=-1)
    return jnp.matmul(cat, wp, precision=hp) + bp


if __name__ == "__main__":
    key = jax.random.PRNGKey(0)
    kx, kq, kk, kv, kp, kb = jax.random.split(key, 6)

    B, T, C = BATCH, BLOCK_SIZE, N_EMBED
    HD = N_HEADS * HEAD_SIZE

    x = jax.random.normal(kx, (B, T, C), dtype=jnp.float32)
    # Deterministic synthetic parameters (scaled like small linear-layer inits).
    wq = jax.random.normal(kq, (C, HD), dtype=jnp.float32) * 0.1
    wk = jax.random.normal(kk, (C, HD), dtype=jnp.float32) * 0.1
    wv = jax.random.normal(kv, (C, HD), dtype=jnp.float32) * 0.1
    wp = jax.random.normal(kp, (HD, C), dtype=jnp.float32) * 0.1
    bp = jax.random.normal(kb, (C,), dtype=jnp.float32) * 0.1

    # One-time parameter prep (weight fusion, scale folding, mask) -- hoisted
    # out of the per-call forward path per the performance review.
    params = prepare_mha_params(wq, wk, wv, wp, bp, n_heads=N_HEADS,
                                head_size=HEAD_SIZE, batch=B, seq_len=T)

    mha = jax.jit(functools.partial(multi_head_attention,
                                    n_heads=N_HEADS, head_size=HEAD_SIZE))
    out = jax.block_until_ready(mha(x, params))

    ref = _reference(x, wq, wk, wv, wp, bp, n_heads=N_HEADS, head_size=HEAD_SIZE)
    assert out.shape == (B, T, C)
    assert jnp.allclose(out, ref, atol=1e-3, rtol=1e-3), "mismatch vs JAX reference"

    print("KERNEL_OK")
</pallas_src>

<mosaic_0001>
module attributes {stable_mosaic.version = 11 : i64} {
  func.func @_mha_kernel(%arg0: memref<16x32xf32, #tpu.memory_space<vmem>>, %arg1: memref<4x32x24xf32, #tpu.memory_space<vmem>>, %arg2: memref<4x8x32xf32, #tpu.memory_space<vmem>>, %arg3: memref<1x32xf32, #tpu.memory_space<vmem>>, %arg4: memref<16x16xf32, #tpu.memory_space<vmem>>, %arg5: memref<4x128xf32, #tpu.memory_space<vmem>>) attributes {dimension_semantics = [], scalar_prefetch = 0 : i64, scratch_operands = 0 : i64, tpu.core_type = #tpu.core_type<tc>} {
    %c0 = arith.constant 0 : index
    %c0_0 = arith.constant 0 : index
    %0 = vector.load %arg0[%c0, %c0_0] : memref<16x32xf32, #tpu.memory_space<vmem>>, vector<16x32xf32>
    %1 = vector.shape_cast %0 : vector<16x32xf32> to vector<1x16x32xf32>
    %2 = vector.shape_cast %1 : vector<1x16x32xf32> to vector<1x16x32xf32>
    %3 = vector.broadcast %2 : vector<1x16x32xf32> to vector<4x16x32xf32>
    %c0_1 = arith.constant 0 : index
    %c0_2 = arith.constant 0 : index
    %c0_3 = arith.constant 0 : index
    %4 = vector.load %arg1[%c0_1, %c0_2, %c0_3] : memref<4x32x24xf32, #tpu.memory_space<vmem>>, vector<4x32x24xf32>
    "tpu.trace_start"() <{level = 10 : i32, message = "hbc,hcf->hbf"}> : () -> ()
    %cst = arith.constant dense<0.000000e+00> : vector<4x16x24xf32>
    %5 = tpu.matmul %3, %4, %cst {dimension_numbers = #tpu.dot_dimension_numbers<[2], [1], [1], [2], [0, 0, 0, 1, 1, 2], [0], [0]>} : vector<4x16x32xf32>, vector<4x32x24xf32>, vector<4x16x24xf32> -> vector<4x16x24xf32>
    "tpu.trace_stop"() : () -> ()
    %6 = vector.extract_strided_slice %5 {offsets = [0, 0, 0], sizes = [4, 16, 8], strides = [1, 1, 1]} : vector<4x16x24xf32> to vector<4x16x8xf32>
    %7 = vector.extract_strided_slice %5 {offsets = [0, 0, 8], sizes = [4, 16, 8], strides = [1, 1, 1]} : vector<4x16x24xf32> to vector<4x16x8xf32>
    %8 = vector.extract_strided_slice %5 {offsets = [0, 0, 16], sizes = [4, 16, 8], strides = [1, 1, 1]} : vector<4x16x24xf32> to vector<4x16x8xf32>
    "tpu.trace_start"() <{level = 10 : i32, message = "hqd,hkd->hqk"}> : () -> ()
    %cst_4 = arith.constant dense<0.000000e+00> : vector<4x16x16xf32>
    %9 = tpu.matmul %6, %7, %cst_4 {dimension_numbers = #tpu.dot_dimension_numbers<[2], [2], [1], [1], [0, 0, 0, 1, 1, 1], [0], [0]>} : vector<4x16x8xf32>, vector<4x16x8xf32>, vector<4x16x16xf32> -> vector<4x16x16xf32>
    "tpu.trace_stop"() : () -> ()
    %c0_5 = arith.constant 0 : index
    %c0_6 = arith.constant 0 : index
    %10 = vector.load %arg4[%c0_5, %c0_6] : memref<16x16xf32, #tpu.memory_space<vmem>>, vector<16x16xf32>
    %11 = vector.shape_cast %10 : vector<16x16xf32> to vector<1x16x16xf32>
    %12 = vector.broadcast %11 : vector<1x16x16xf32> to vector<4x16x16xf32>
    %13 = arith.addf %9, %12 : vector<4x16x16xf32>
    %cst_7 = arith.constant dense<0xFF800000> : vector<4x16xf32>
    %14 = vector.multi_reduction <maximumf>, %13, %cst_7 [2] : vector<4x16x16xf32> to vector<4x16xf32>
    %15 = vector.shape_cast %14 : vector<4x16xf32> to vector<4x16x1xf32>
    %16 = vector.broadcast %15 : vector<4x16x1xf32> to vector<4x16x16xf32>
    %17 = arith.subf %13, %16 : vector<4x16x16xf32>
    %18 = math.exp %17 : vector<4x16x16xf32>
    %cst_8 = arith.constant dense<0.000000e+00> : vector<4x16xf32>
    %19 = vector.multi_reduction <add>, %18, %cst_8 [2] : vector<4x16x16xf32> to vector<4x16xf32>
    %20 = vector.shape_cast %19 : vector<4x16xf32> to vector<4x16x1xf32>
    "tpu.trace_start"() <{level = 10 : i32, message = "hqk,hkd->hqd"}> : () -> ()
    %cst_9 = arith.constant dense<0.000000e+00> : vector<4x16x8xf32>
    %21 = tpu.matmul %18, %8, %cst_9 {dimension_numbers = #tpu.dot_dimension_numbers<[2], [1], [1], [2], [0, 0, 0, 1, 1, 2], [0], [0]>} : vector<4x16x16xf32>, vector<4x16x8xf32>, vector<4x16x8xf32> -> vector<4x16x8xf32>
    "tpu.trace_stop"() : () -> ()
    %22 = vector.broadcast %20 : vector<4x16x1xf32> to vector<4x16x8xf32>
    %23 = arith.divf %21, %22 : vector<4x16x8xf32>
    %c0_10 = arith.constant 0 : index
    %c0_11 = arith.constant 0 : index
    %c0_12 = arith.constant 0 : index
    %24 = vector.load %arg2[%c0_10, %c0_11, %c0_12] : memref<4x8x32xf32, #tpu.memory_space<vmem>>, vector<4x8x32xf32>
    "tpu.trace_start"() <{level = 10 : i32, message = "hqd,hdc->hqc"}> : () -> ()
    %cst_13 = arith.constant dense<0.000000e+00> : vector<4x16x32xf32>
    %25 = tpu.matmul %23, %24, %cst_13 {dimension_numbers = #tpu.dot_dimension_numbers<[2], [1], [1], [2], [0, 0, 0, 1, 1, 2], [0], [0]>} : vector<4x16x8xf32>, vector<4x8x32xf32>, vector<4x16x32xf32> -> vector<4x16x32xf32>
    "tpu.trace_stop"() : () -> ()
    %cst_14 = arith.constant dense<0.000000e+00> : vector<16x32xf32>
    %26 = vector.multi_reduction <add>, %25, %cst_14 [0] : vector<4x16x32xf32> to vector<16x32xf32>
    %c0_15 = arith.constant 0 : index
    %c0_16 = arith.constant 0 : index
    %27 = vector.load %arg3[%c0_15, %c0_16] : memref<1x32xf32, #tpu.memory_space<vmem>>, vector<1x32xf32>
    %28 = vector.broadcast %27 : vector<1x32xf32> to vector<16x32xf32>
    %29 = arith.addf %26, %28 : vector<16x32xf32>
    %30 = vector.extract_strided_slice %29 {offsets = [0, 0], sizes = [4, 32], strides = [1, 1]} : vector<16x32xf32> to vector<4x32xf32>
    %31 = vector.extract_strided_slice %29 {offsets = [4, 0], sizes = [4, 32], strides = [1, 1]} : vector<16x32xf32> to vector<4x32xf32>
    %32 = vector.extract_strided_slice %29 {offsets = [8, 0], sizes = [4, 32], strides = [1, 1]} : vector<16x32xf32> to vector<4x32xf32>
    %33 = vector.extract_strided_slice %29 {offsets = [12, 0], sizes = [4, 32], strides = [1, 1]} : vector<16x32xf32> to vector<4x32xf32>
    %34 = tpu.concatenate %30, %31, %32, %33 in 1 : vector<4x32xf32>, vector<4x32xf32>, vector<4x32xf32>, vector<4x32xf32> -> vector<4x128xf32>
    %c0_17 = arith.constant 0 : index
    %c0_18 = arith.constant 0 : index
    %35 = vector.load %arg5[%c0_17, %c0_18] : memref<4x128xf32, #tpu.memory_space<vmem>>, vector<4x128xf32>
    tpu.vector_store %arg5[%c0_17, %c0_18], %34 {strides = array<i32>} : memref<4x128xf32, #tpu.memory_space<vmem>>, vector<4x128xf32>,
    return
  }
}

</mosaic_0001>

<llo_original>
// kernel: multi_head_attention.1
$region0: #{multi_head_attention.1}
  #allocation0 [shape = 'u32[]', space=smem, size = 0x4, offset = 0x4, fixed_abs, tag = 'smem constant byte address 0x4 - core index']
  #allocation1 [shape = 'u32[72,128]{1,0:T(1,128)}', space=vmem, size = 0x9000, scoped, tag = 'internal scratch']
  %s0 = inlined_call_operand.vmem [shape: f32[16,32], index: 0, kind: input, shape index: {}]
  %s1 = inlined_call_operand.vmem [shape: f32[4,32,24], index: 1, kind: input, shape index: {}]
  %s2 = inlined_call_operand.vmem [shape: f32[4,8,32], index: 2, kind: input, shape index: {}]
  %s3 = inlined_call_operand.vmem [shape: f32[1,32], index: 3, kind: input, shape index: {}]
  %s4 = inlined_call_operand.vmem [shape: f32[16,16], index: 4, kind: input, shape index: {}]
  %s5 = inlined_call_operand.vmem [shape: f32[4,128], index: 5, kind: output, shape index: {}]
  %s6 = sld [smem:[#allocation0]]
  $region30: #{multi_head_attention.1} parent=0
    _
  %s8 = ssub.s32 1, %s6
  %s9 = scalar_select 0, %s8, %s6
  // Predicated region
  $region2: #{multi_head_attention.1} parent=0 // pred_check
    _
  $region3: #{multi_head_attention.1} parent=0 // pred_check_branch
    %11 = sbr.rel (0) target = $region5
  $region4: #{multi_head_attention.1} parent=0 // pred_region
    _
  $region5: #{multi_head_attention.1} parent=0 // pred_fallthru
    _
  // Predicated region
  $region6: #{multi_head_attention.1} parent=0 // pred_check
    _
  $region7: #{multi_head_attention.1} parent=0 // pred_check_branch
    %13 = sbr.rel (0) target = $region9
  $region8: #{multi_head_attention.1} parent=0 // pred_region
    _
  $region9: #{multi_head_attention.1} parent=0 // pred_fallthru
    _
  // Predicated region
  $region10: #{multi_head_attention.1} parent=0 // pred_check
    _
  $region11: #{multi_head_attention.1} parent=0 // pred_check_branch
    %15 = sbr.rel (0) target = $region13
  $region12: #{multi_head_attention.1} parent=0 // pred_region
    _
  $region13: #{multi_head_attention.1} parent=0 // pred_fallthru
    _
  // Predicated region
  $region14: #{multi_head_attention.1} parent=0 // pred_check
    _
  $region15: #{multi_head_attention.1} parent=0 // pred_check_branch
    %17 = sbr.rel (0) target = $region17
  $region16: #{multi_head_attention.1} parent=0 // pred_region
    _
  $region17: #{multi_head_attention.1} parent=0 // pred_fallthru
    _
  // Predicated region
  $region18: #{multi_head_attention.1} parent=0 // pred_check
    _
  $region19: #{multi_head_attention.1} parent=0 // pred_check_branch
    %19 = sbr.rel (0) target = $region21
  $region20: #{multi_head_attention.1} parent=0 // pred_region
    _
  $region21: #{multi_head_attention.1} parent=0 // pred_fallthru
    _
  %v20 = vld [vmem:[%s0] sm:$0xff]
  %v21 = vld [vmem:[%s0 + $0x8] sm:$0xff]
  %v22 = vld [vmem:[%s1] sm:$0xff]
  %v23 = vld [vmem:[%s1 + $0x8] sm:$0xff]
  %v24 = vld [vmem:[%s1 + $0x10] sm:$0xff]
  %v25 = vld [vmem:[%s1 + $0x18] sm:$0xff]
  %v26 = vld [vmem:[%s1 + $0x20] sm:$0xff]
  %v27 = vld [vmem:[%s1 + $0x28] sm:$0xff]
  %v28 = vld [vmem:[%s1 + $0x30] sm:$0xff]
  %v29 = vld [vmem:[%s1 + $0x38] sm:$0xff]
  %v30 = vld [vmem:[%s1 + $0x40] sm:$0xff]
  %v31 = vld [vmem:[%s1 + $0x48] sm:$0xff]
  %v32 = vld [vmem:[%s1 + $0x50] sm:$0xff]
  %v33 = vld [vmem:[%s1 + $0x58] sm:$0xff]
  %v34 = vld [vmem:[%s1 + $0x60] sm:$0xff]
  %v35 = vld [vmem:[%s1 + $0x68] sm:$0xff]
  %v36 = vld [vmem:[%s1 + $0x70] sm:$0xff]
  %v37 = vld [vmem:[%s1 + $0x78] sm:$0xff]
  %vm38 = vcmask 261120
  %v40 = vsel %vm38, %v20, 0
  %v43 = vsel %vm38, %v21, 0
  %45 = vmatpush.msra.mxu0 0.0
  %46 = vmatpush.msra.mxu0 0.0
  %47 = vmatpush.msra.mxu0 0.0
  %48 = vmatpush.msra.mxu0 0.0
  %49 = vmatpush.msra.mxu0 0.0
  %50 = vmatpush.msra.mxu0 0.0
  %51 = vmatpush.msra.mxu0 0.0
  %52 = vmatpush.msra.mxu0 0.0
  %53 = vmatpush.msra.mxu0 0.0
  %54 = vmatpush.msra.mxu0 0.0
  %55 = vmatpush.msra.mxu0 0.0
  %56 = vmatpush.msra.mxu0 0.0
  %57 = vmatpush.msra.mxu0 %v25
  %58 = vmatpush.msra.mxu0 %v24
  %59 = vmatpush.msra.mxu0 %v23
  %60 = vmatpush.msra.mxu0 %v22
  %61 = vmatmul.f32.gmra.mxu0 %v40
  %v62 = vpop.f32.mrf.mxu0
  %v63 = vadd.f32 0.0, %v62
  %64 = vmatmul.f32.gmra.mxu0 %v43
  %v65 = vpop.f32.mrf.mxu0
  %v66 = vadd.f32 0.0, %v65
  %67 = vdwg.mxu0
  %68 = vmatpush.msra.mxu0 0.0
  %69 = vmatpush.msra.mxu0 0.0
  %70 = vmatpush.msra.mxu0 0.0
  %71 = vmatpush.msra.mxu0 0.0
  %72 = vmatpush.msra.mxu0 0.0
  %73 = vmatpush.msra.mxu0 0.0
  %74 = vmatpush.msra.mxu0 0.0
  %75 = vmatpush.msra.mxu0 0.0
  %76 = vmatpush.msra.mxu0 0.0
  %77 = vmatpush.msra.mxu0 0.0
  %78 = vmatpush.msra.mxu0 0.0
  %79 = vmatpush.msra.mxu0 0.0
  %80 = vmatpush.msra.mxu0 %v29
  %81 = vmatpush.msra.mxu0 %v28
  %82 = vmatpush.msra.mxu0 %v27
  %83 = vmatpush.msra.mxu0 %v26
  %84 = vmatmul.f32.gmra.mxu0 %v40
  %v85 = vpop.f32.mrf.mxu0
  %v86 = vadd.f32 0.0, %v85
  %87 = vmatmul.f32.gmra.mxu0 %v43
  %v88 = vpop.f32.mrf.mxu0
  %v89 = vadd.f32 0.0, %v88
  %90 = vdwg.mxu0
  %91 = vmatpush.msra.mxu0 0.0
  %92 = vmatpush.msra.mxu0 0.0
  %93 = vmatpush.msra.mxu0 0.0
  %94 = vmatpush.msra.mxu0 0.0
  %95 = vmatpush.msra.mxu0 0.0
  %96 = vmatpush.msra.mxu0 0.0
  %97 = vmatpush.msra.mxu0 0.0
  %98 = vmatpush.msra.mxu0 0.0
  %99 = vmatpush.msra.mxu0 0.0
  %100 = vmatpush.msra.mxu0 0.0
  %101 = vmatpush.msra.mxu0 0.0
  %102 = vmatpush.msra.mxu0 0.0
  %103 = vmatpush.msra.mxu0 %v33
  %104 = vmatpush.msra.mxu0 %v32
  %105 = vmatpush.msra.mxu0 %v31
  %106 = vmatpush.msra.mxu0 %v30
  %107 = vmatmul.f32.gmra.mxu0 %v40
  %v108 = vpop.f32.mrf.mxu0
  %v109 = vadd.f32 0.0, %v108
  %110 = vmatmul.f32.gmra.mxu0 %v43
  %v111 = vpop.f32.mrf.mxu0
  %v112 = vadd.f32 0.0, %v111
  %113 = vdwg.mxu0
  %114 = vmatpush.msra.mxu0 0.0
  %115 = vmatpush.msra.mxu0 0.0
  %116 = vmatpush.msra.mxu0 0.0
  %117 = vmatpush.msra.mxu0 0.0
  %118 = vmatpush.msra.mxu0 0.0
  %119 = vmatpush.msra.mxu0 0.0
  %120 = vmatpush.msra.mxu0 0.0
  %121 = vmatpush.msra.mxu0 0.0
  %122 = vmatpush.msra.mxu0 0.0
  %123 = vmatpush.msra.mxu0 0.0
  %124 = vmatpush.msra.mxu0 0.0
  %125 = vmatpush.msra.mxu0 0.0
  %126 = vmatpush.msra.mxu0 %v37
  %127 = vmatpush.msra.mxu0 %v36
  %128 = vmatpush.msra.mxu0 %v35
  %129 = vmatpush.msra.mxu0 %v34
  %130 = vmatmul.f32.gmra.mxu0 %v40
  %v131 = vpop.f32.mrf.mxu0
  %v132 = vadd.f32 0.0, %v131
  %133 = vmatmul.f32.gmra.mxu0 %v43
  %v134 = vpop.f32.mrf.mxu0
  %v135 = vadd.f32 0.0, %v134
  %136 = vdwg.mxu0
  %v137 = vld [vmem:[%s4] sm:$0xff]
  %v138 = vld [vmem:[%s4 + $0x8] sm:$0xff]
  %141 = vrot.lane.b32.xlu0 %v63, 120
  %v142 = vpop.permute.xlu0 %141
  %143 = vrot.lane.b32.xlu0 %v66, 120
  %v144 = vpop.permute.xlu0 %143
  %vm145 = vcmask 64512
  %v146 = vsel %vm145, %v63, 0
  %v148 = vsel %vm145, %v66, 0
  %v150 = vsel %vm145, %v142, 0
  %v152 = vsel %vm145, %v144, 0
  %154 = vmatpush.xpose.msra.mxu0 0.0
  %155 = vmatpush.xpose.msra.mxu0 0.0
  %156 = vmatpush.xpose.msra.mxu0 0.0
  %157 = vmatpush.xpose.msra.mxu0 0.0
  %158 = vmatpush.xpose.msra.mxu0 0.0
  %159 = vmatpush.xpose.msra.mxu0 0.0
  %160 = vmatpush.xpose.msra.mxu0 0.0
  %161 = vmatpush.xpose.msra.mxu0 0.0
  %162 = vmatpush.xpose.msra.mxu0 0.0
  %163 = vmatpush.xpose.msra.mxu0 0.0
  %164 = vmatpush.xpose.msra.mxu0 0.0
  %165 = vmatpush.xpose.msra.mxu0 0.0
  %166 = vmatpush.xpose.msra.mxu0 0.0
  %167 = vmatpush.xpose.msra.mxu0 0.0
  %168 = vmatpush.xpose.msra.mxu0 %v152
  %169 = vmatpush.xpose.msra.mxu0 %v150
  %170 = vmatmul.f32.gmra.mxu0 %v146
  %v171 = vpop.f32.mrf.mxu0
  %v172 = vadd.f32 %v137, %v171
  %173 = vmatmul.f32.gmra.mxu0 %v148
  %v174 = vpop.f32.mrf.mxu0
  %v175 = vadd.f32 %v138, %v174
  %176 = vdwg.mxu0
  %179 = vrot.lane.b32.xlu0 %v86, 120
  %v180 = vpop.permute.xlu0 %179
  %181 = vrot.lane.b32.xlu0 %v89, 120
  %v182 = vpop.permute.xlu0 %181
  %v183 = vsel %vm145, %v86, 0
  %v185 = vsel %vm145, %v89, 0
  %v187 = vsel %vm145, %v180, 0
  %v189 = vsel %vm145, %v182, 0
  %191 = vmatpush.xpose.msra.mxu0 0.0
  %192 = vmatpush.xpose.msra.mxu0 0.0
  %193 = vmatpush.xpose.msra.mxu0 0.0
  %194 = vmatpush.xpose.msra.mxu0 0.0
  %195 = vmatpush.xpose.msra.mxu0 0.0
  %196 = vmatpush.xpose.msra.mxu0 0.0
  %197 = vmatpush.xpose.msra.mxu0 0.0
  %198 = vmatpush.xpose.msra.mxu0 0.0
  %199 = vmatpush.xpose.msra.mxu0 0.0
  %200 = vmatpush.xpose.msra.mxu0 0.0
  %201 = vmatpush.xpose.msra.mxu0 0.0
  %202 = vmatpush.xpose.msra.mxu0 0.0
  %203 = vmatpush.xpose.msra.mxu0 0.0
  %204 = vmatpush.xpose.msra.mxu0 0.0
  %205 = vmatpush.xpose.msra.mxu0 %v189
  %206 = vmatpush.xpose.msra.mxu0 %v187
  %207 = vmatmul.f32.gmra.mxu0 %v183
  %v208 = vpop.f32.mrf.mxu0
  %v209 = vadd.f32 %v137, %v208
  %210 = vmatmul.f32.gmra.mxu0 %v185
  %v211 = vpop.f32.mrf.mxu0
  %v212 = vadd.f32 %v138, %v211
  %213 = vdwg.mxu0
  %216 = vrot.lane.b32.xlu0 %v109, 120
  %v217 = vpop.permute.xlu0 %216
  %218 = vrot.lane.b32.xlu0 %v112, 120
  %v219 = vpop.permute.xlu0 %218
  %v220 = vsel %vm145, %v109, 0
  %v222 = vsel %vm145, %v112, 0
  %v224 = vsel %vm145, %v217, 0
  %v226 = vsel %vm145, %v219, 0
  %228 = vmatpush.xpose.msra.mxu0 0.0
  %229 = vmatpush.xpose.msra.mxu0 0.0
  %230 = vmatpush.xpose.msra.mxu0 0.0
  %231 = vmatpush.xpose.msra.mxu0 0.0
  %232 = vmatpush.xpose.msra.mxu0 0.0
  %233 = vmatpush.xpose.msra.mxu0 0.0
  %234 = vmatpush.xpose.msra.mxu0 0.0
  %235 = vmatpush.xpose.msra.mxu0 0.0
  %236 = vmatpush.xpose.msra.mxu0 0.0
  %237 = vmatpush.xpose.msra.mxu0 0.0
  %238 = vmatpush.xpose.msra.mxu0 0.0
  %239 = vmatpush.xpose.msra.mxu0 0.0
  %240 = vmatpush.xpose.msra.mxu0 0.0
  %241 = vmatpush.xpose.msra.mxu0 0.0
  %242 = vmatpush.xpose.msra.mxu0 %v226
  %243 = vmatpush.xpose.msra.mxu0 %v224
  %244 = vmatmul.f32.gmra.mxu0 %v220
  %v245 = vpop.f32.mrf.mxu0
  %v246 = vadd.f32 %v137, %v245
  %247 = vmatmul.f32.gmra.mxu0 %v222
  %v248 = vpop.f32.mrf.mxu0
  %v249 = vadd.f32 %v138, %v248
  %250 = vdwg.mxu0
  %253 = vrot.lane.b32.xlu0 %v132, 120
  %v254 = vpop.permute.xlu0 %253
  %255 = vrot.lane.b32.xlu0 %v135, 120
  %v256 = vpop.permute.xlu0 %255
  %v257 = vsel %vm145, %v132, 0
  %v259 = vsel %vm145, %v135, 0
  %v261 = vsel %vm145, %v254, 0
  %v263 = vsel %vm145, %v256, 0
  %265 = vmatpush.xpose.msra.mxu0 0.0
  %266 = vmatpush.xpose.msra.mxu0 0.0
  %267 = vmatpush.xpose.msra.mxu0 0.0
  %268 = vmatpush.xpose.msra.mxu0 0.0
  %269 = vmatpush.xpose.msra.mxu0 0.0
  %270 = vmatpush.xpose.msra.mxu0 0.0
  %271 = vmatpush.xpose.msra.mxu0 0.0
  %272 = vmatpush.xpose.msra.mxu0 0.0
  %273 = vmatpush.xpose.msra.mxu0 0.0
  %274 = vmatpush.xpose.msra.mxu0 0.0
  %275 = vmatpush.xpose.msra.mxu0 0.0
  %276 = vmatpush.xpose.msra.mxu0 0.0
  %277 = vmatpush.xpose.msra.mxu0 0.0
  %278 = vmatpush.xpose.msra.mxu0 0.0
  %279 = vmatpush.xpose.msra.mxu0 %v263
  %280 = vmatpush.xpose.msra.mxu0 %v261
  %281 = vmatmul.f32.gmra.mxu0 %v257
  %v282 = vpop.f32.mrf.mxu0
  %v283 = vadd.f32 %v137, %v282
  %284 = vmatmul.f32.gmra.mxu0 %v259
  %v285 = vpop.f32.mrf.mxu0
  %v286 = vadd.f32 %v138, %v285
  %287 = vdwg.mxu0
  %vm288 = vcmask 130048
  %v289 = vsel %vm288, %v172, -inf
  %290 = vmax.xlane.f32.xlu0 %v289
  %v291 = vpop.xlane.xlu0 %290
  %v292 = vsel %vm288, %v175, -inf
  %293 = vmax.xlane.f32.xlu0 %v292
  %v294 = vpop.xlane.xlu0 %293
  %v295 = vsel %vm288, %v209, -inf
  %296 = vmax.xlane.f32.xlu0 %v295
  %v297 = vpop.xlane.xlu0 %296
  %v298 = vsel %vm288, %v212, -inf
  %299 = vmax.xlane.f32.xlu0 %v298
  %v300 = vpop.xlane.xlu0 %299
  %v301 = vsel %vm288, %v246, -inf
  %302 = vmax.xlane.f32.xlu0 %v301
  %v303 = vpop.xlane.xlu0 %302
  %v304 = vsel %vm288, %v249, -inf
  %305 = vmax.xlane.f32.xlu0 %v304
  %v306 = vpop.xlane.xlu0 %305
  %v307 = vsel %vm288, %v283, -inf
  %308 = vmax.xlane.f32.xlu0 %v307
  %v309 = vpop.xlane.xlu0 %308
  %v310 = vsel %vm288, %v286, -inf
  %311 = vmax.xlane.f32.xlu0 %v310
  %v312 = vpop.xlane.xlu0 %311
  %v313 = vsub.f32 %v172, %v291
  %v314 = vsub.f32 %v175, %v294
  %v315 = vsub.f32 %v209, %v297
  %v316 = vsub.f32 %v212, %v300
  %v317 = vsub.f32 %v246, %v303
  %v318 = vsub.f32 %v249, %v306
  %v319 = vsub.f32 %v283, %v309
  %v320 = vsub.f32 %v286, %v312
  %v321 = vmul.f32 %v313, 1.442695
  %v322 = vpow.pop %v321
  %v323 = vmul.f32 %v314, 1.442695
  %v324 = vpow.pop %v323
  %v325 = vmul.f32 %v315, 1.442695
  %v326 = vpow.pop %v325
  %v327 = vmul.f32 %v316, 1.442695
  %v328 = vpow.pop %v327
  %v329 = vmul.f32 %v317, 1.442695
  %v330 = vpow.pop %v329
  %v331 = vmul.f32 %v318, 1.442695
  %v332 = vpow.pop %v331
  %v333 = vmul.f32 %v319, 1.442695
  %v334 = vpow.pop %v333
  %v335 = vmul.f32 %v320, 1.442695
  %v336 = vpow.pop %v335
  %v337 = vsel %vm288, %v322, 0.0
  %338 = vadd.xlane.f32.xlu0 %v337
  %v339 = vpop.xlane.xlu0 %338
  %v340 = vsel %vm288, %v324, 0.0
  %341 = vadd.xlane.f32.xlu0 %v340
  %v342 = vpop.xlane.xlu0 %341
  %v343 = vsel %vm288, %v326, 0.0
  %344 = vadd.xlane.f32.xlu0 %v343
  %v345 = vpop.xlane.xlu0 %344
  %v346 = vsel %vm288, %v328, 0.0
  %347 = vadd.xlane.f32.xlu0 %v346
  %v348 = vpop.xlane.xlu0 %347
  %v349 = vsel %vm288, %v330, 0.0
  %350 = vadd.xlane.f32.xlu0 %v349
  %v351 = vpop.xlane.xlu0 %350
  %v352 = vsel %vm288, %v332, 0.0
  %353 = vadd.xlane.f32.xlu0 %v352
  %v354 = vpop.xlane.xlu0 %353
  %v355 = vsel %vm288, %v334, 0.0
  %356 = vadd.xlane.f32.xlu0 %v355
  %v357 = vpop.xlane.xlu0 %356
  %v358 = vsel %vm288, %v336, 0.0
  %359 = vadd.xlane.f32.xlu0 %v358
  %v360 = vpop.xlane.xlu0 %359
  %361 = vrot.lane.b32.xlu0 %v63, 112
  %v362 = vpop.permute.xlu0 %361
  %363 = vrot.lane.b32.xlu0 %v66, 112
  %v364 = vpop.permute.xlu0 %363
  %v368 = vsel %vm288, %v322, 0
  %v371 = vsel %vm288, %v324, 0
  %373 = vmatpush.msra.mxu0 0.0
  %374 = vmatpush.msra.mxu0 0.0
  %375 = vmatpush.msra.mxu0 0.0
  %376 = vmatpush.msra.mxu0 0.0
  %377 = vmatpush.msra.mxu0 0.0
  %378 = vmatpush.msra.mxu0 0.0
  %379 = vmatpush.msra.mxu0 0.0
  %380 = vmatpush.msra.mxu0 0.0
  %381 = vmatpush.msra.mxu0 0.0
  %382 = vmatpush.msra.mxu0 0.0
  %383 = vmatpush.msra.mxu0 0.0
  %384 = vmatpush.msra.mxu0 0.0
  %385 = vmatpush.msra.mxu0 0.0
  %386 = vmatpush.msra.mxu0 0.0
  %387 = vmatpush.msra.mxu0 %v364
  %388 = vmatpush.msra.mxu0 %v362
  %389 = vmatmul.f32.gmra.mxu0 %v368
  %v390 = vpop.f32.mrf.mxu0
  %v391 = vadd.f32 0.0, %v390
  %392 = vmatmul.f32.gmra.mxu0 %v371
  %v393 = vpop.f32.mrf.mxu0
  %v394 = vadd.f32 0.0, %v393
  %395 = vdwg.mxu0
  %396 = vrot.lane.b32.xlu0 %v86, 112
  %v397 = vpop.permute.xlu0 %396
  %398 = vrot.lane.b32.xlu0 %v89, 112
  %v399 = vpop.permute.xlu0 %398
  %v403 = vsel %vm288, %v326, 0
  %v406 = vsel %vm288, %v328, 0
  %408 = vmatpush.msra.mxu0 0.0
  %409 = vmatpush.msra.mxu0 0.0
  %410 = vmatpush.msra.mxu0 0.0
  %411 = vmatpush.msra.mxu0 0.0
  %412 = vmatpush.msra.mxu0 0.0
  %413 = vmatpush.msra.mxu0 0.0
  %414 = vmatpush.msra.mxu0 0.0
  %415 = vmatpush.msra.mxu0 0.0
  %416 = vmatpush.msra.mxu0 0.0
  %417 = vmatpush.msra.mxu0 0.0
  %418 = vmatpush.msra.mxu0 0.0
  %419 = vmatpush.msra.mxu0 0.0
  %420 = vmatpush.msra.mxu0 0.0
  %421 = vmatpush.msra.mxu0 0.0
  %422 = vmatpush.msra.mxu0 %v399
  %423 = vmatpush.msra.mxu0 %v397
  %424 = vmatmul.f32.gmra.mxu0 %v403
  %v425 = vpop.f32.mrf.mxu0
  %v426 = vadd.f32 0.0, %v425
  %427 = vmatmul.f32.gmra.mxu0 %v406
  %v428 = vpop.f32.mrf.mxu0
  %v429 = vadd.f32 0.0, %v428
  %430 = vdwg.mxu0
  %431 = vrot.lane.b32.xlu0 %v109, 112
  %v432 = vpop.permute.xlu0 %431
  %433 = vrot.lane.b32.xlu0 %v112, 112
  %v434 = vpop.permute.xlu0 %433
  %v438 = vsel %vm288, %v330, 0
  %v441 = vsel %vm288, %v332, 0
  %443 = vmatpush.msra.mxu0 0.0
  %444 = vmatpush.msra.mxu0 0.0
  %445 = vmatpush.msra.mxu0 0.0
  %446 = vmatpush.msra.mxu0 0.0
  %447 = vmatpush.msra.mxu0 0.0
  %448 = vmatpush.msra.mxu0 0.0
  %449 = vmatpush.msra.mxu0 0.0
  %450 = vmatpush.msra.mxu0 0.0
  %451 = vmatpush.msra.mxu0 0.0
  %452 = vmatpush.msra.mxu0 0.0
  %453 = vmatpush.msra.mxu0 0.0
  %454 = vmatpush.msra.mxu0 0.0
  %455 = vmatpush.msra.mxu0 0.0
  %456 = vmatpush.msra.mxu0 0.0
  %457 = vmatpush.msra.mxu0 %v434
  %458 = vmatpush.msra.mxu0 %v432
  %459 = vmatmul.f32.gmra.mxu0 %v438
  %v460 = vpop.f32.mrf.mxu0
  %v461 = vadd.f32 0.0, %v460
  %462 = vmatmul.f32.gmra.mxu0 %v441
  %v463 = vpop.f32.mrf.mxu0
  %v464 = vadd.f32 0.0, %v463
  %465 = vdwg.mxu0
  %466 = vrot.lane.b32.xlu0 %v132, 112
  %v467 = vpop.permute.xlu0 %466
  %468 = vrot.lane.b32.xlu0 %v135, 112
  %v469 = vpop.permute.xlu0 %468
  %v473 = vsel %vm288, %v334, 0
  %v476 = vsel %vm288, %v336, 0
  %478 = vmatpush.msra.mxu0 0.0
  %479 = vmatpush.msra.mxu0 0.0
  %480 = vmatpush.msra.mxu0 0.0
  %481 = vmatpush.msra.mxu0 0.0
  %482 = vmatpush.msra.mxu0 0.0
  %483 = vmatpush.msra.mxu0 0.0
  %484 = vmatpush.msra.mxu0 0.0
  %485 = vmatpush.msra.mxu0 0.0
  %486 = vmatpush.msra.mxu0 0.0
  %487 = vmatpush.msra.mxu0 0.0
  %488 = vmatpush.msra.mxu0 0.0
  %489 = vmatpush.msra.mxu0 0.0
  %490 = vmatpush.msra.mxu0 0.0
  %491 = vmatpush.msra.mxu0 0.0
  %492 = vmatpush.msra.mxu0 %v469
  %493 = vmatpush.msra.mxu0 %v467
  %494 = vmatmul.f32.gmra.mxu0 %v473
  %v495 = vpop.f32.mrf.mxu0
  %v496 = vadd.f32 0.0, %v495
  %497 = vmatmul.f32.gmra.mxu0 %v476
  %v498 = vpop.f32.mrf.mxu0
  %v499 = vadd.f32 0.0, %v498
  %500 = vdwg.mxu0
  %v501 = vrcp.pop %v339
  %v502 = vmul.f32 %v339, %v501
  %v503 = vsub.f32 1.0, %v502
  %v504 = vmul.f32 %v501, %v503
  %v505 = vadd.f32 %v501, %v504
  %vm506 = vweird.f32 %v339
  %vm507 = vweird.f32 %v501
  %vm508 = vmor %vm506, %vm507
  %v509 = vsel %vm508, %v501, %v505
  %v510 = vand.u32 2147483647, %v339
  %vm511 = vcmp.eq.f32.partialorder %v510, 8.507059e+37
  %v512 = vand.u32 %v339, 2147483648
  %v513 = vor.u32 1.1754944e-38, %v512
  %v514 = vsel %vm511, %v513, %v509
  %v515 = vmul.f32 %v391, %v514
  %v516 = vrcp.pop %v342
  %v517 = vmul.f32 %v342, %v516
  %v518 = vsub.f32 1.0, %v517
  %v519 = vmul.f32 %v516, %v518
  %v520 = vadd.f32 %v516, %v519
  %vm521 = vweird.f32 %v342
  %vm522 = vweird.f32 %v516
  %vm523 = vmor %vm521, %vm522
  %v524 = vsel %vm523, %v516, %v520
  %v525 = vand.u32 2147483647, %v342
  %vm526 = vcmp.eq.f32.partialorder %v525, 8.507059e+37
  %v527 = vand.u32 %v342, 2147483648
  %v528 = vor.u32 1.1754944e-38, %v527
  %v529 = vsel %vm526, %v528, %v524
  %v530 = vmul.f32 %v394, %v529
  %v531 = vrcp.pop %v345
  %v532 = vmul.f32 %v345, %v531
  %v533 = vsub.f32 1.0, %v532
  %v534 = vmul.f32 %v531, %v533
  %v535 = vadd.f32 %v531, %v534
  %vm536 = vweird.f32 %v345
  %vm537 = vweird.f32 %v531
  %vm538 = vmor %vm536, %vm537
  %v539 = vsel %vm538, %v531, %v535
  %v540 = vand.u32 2147483647, %v345
  %vm541 = vcmp.eq.f32.partialorder %v540, 8.507059e+37
  %v542 = vand.u32 %v345, 2147483648
  %v543 = vor.u32 1.1754944e-38, %v542
  %v544 = vsel %vm541, %v543, %v539
  %v545 = vmul.f32 %v426, %v544
  %v546 = vrcp.pop %v348
  %v547 = vmul.f32 %v348, %v546
  %v548 = vsub.f32 1.0, %v547
  %v549 = vmul.f32 %v546, %v548
  %v550 = vadd.f32 %v546, %v549
  %vm551 = vweird.f32 %v348
  %vm552 = vweird.f32 %v546
  %vm553 = vmor %vm551, %vm552
  %v554 = vsel %vm553, %v546, %v550
  %v555 = vand.u32 2147483647, %v348
  %vm556 = vcmp.eq.f32.partialorder %v555, 8.507059e+37
  %v557 = vand.u32 %v348, 2147483648
  %v558 = vor.u32 1.1754944e-38, %v557
  %v559 = vsel %vm556, %v558, %v554
  %v560 = vmul.f32 %v429, %v559
  %v561 = vrcp.pop %v351
  %v562 = vmul.f32 %v351, %v561
  %v563 = vsub.f32 1.0, %v562
  %v564 = vmul.f32 %v561, %v563
  %v565 = vadd.f32 %v561, %v564
  %vm566 = vweird.f32 %v351
  %vm567 = vweird.f32 %v561
  %vm568 = vmor %vm566, %vm567
  %v569 = vsel %vm568, %v561, %v565
  %v570 = vand.u32 2147483647, %v351
  %vm571 = vcmp.eq.f32.partialorder %v570, 8.507059e+37
  %v572 = vand.u32 %v351, 2147483648
  %v573 = vor.u32 1.1754944e-38, %v572
  %v574 = vsel %vm571, %v573, %v569
  %v575 = vmul.f32 %v461, %v574
  %v576 = vrcp.pop %v354
  %v577 = vmul.f32 %v354, %v576
  %v578 = vsub.f32 1.0, %v577
  %v579 = vmul.f32 %v576, %v578
  %v580 = vadd.f32 %v576, %v579
  %vm581 = vweird.f32 %v354
  %vm582 = vweird.f32 %v576
  %vm583 = vmor %vm581, %vm582
  %v584 = vsel %vm583, %v576, %v580
  %v585 = vand.u32 2147483647, %v354
  %vm586 = vcmp.eq.f32.partialorder %v585, 8.507059e+37
  %v587 = vand.u32 %v354, 2147483648
  %v588 = vor.u32 1.1754944e-38, %v587
  %v589 = vsel %vm586, %v588, %v584
  %v590 = vmul.f32 %v464, %v589
  %v591 = vrcp.pop %v357
  %v592 = vmul.f32 %v357, %v591
  %v593 = vsub.f32 1.0, %v592
  %v594 = vmul.f32 %v591, %v593
  %v595 = vadd.f32 %v591, %v594
  %vm596 = vweird.f32 %v357
  %vm597 = vweird.f32 %v591
  %vm598 = vmor %vm596, %vm597
  %v599 = vsel %vm598, %v591, %v595
  %v600 = vand.u32 2147483647, %v357
  %vm601 = vcmp.eq.f32.partialorder %v600, 8.507059e+37
  %v602 = vand.u32 %v357, 2147483648
  %v603 = vor.u32 1.1754944e-38, %v602
  %v604 = vsel %vm601, %v603, %v599
  %v605 = vmul.f32 %v496, %v604
  %v606 = vrcp.pop %v360
  %v607 = vmul.f32 %v360, %v606
  %v608 = vsub.f32 1.0, %v607
  %v609 = vmul.f32 %v606, %v608
  %v610 = vadd.f32 %v606, %v609
  %vm611 = vweird.f32 %v360
  %vm612 = vweird.f32 %v606
  %vm613 = vmor %vm611, %vm612
  %v614 = vsel %vm613, %v606, %v610
  %v615 = vand.u32 2147483647, %v360
  %vm616 = vcmp.eq.f32.partialorder %v615, 8.507059e+37
  %v617 = vand.u32 %v360, 2147483648
  %v618 = vor.u32 1.1754944e-38, %v617
  %v619 = vsel %vm616, %v618, %v614
  %v620 = vmul.f32 %v499, %v619
  %v621 = vld [vmem:[%s2] sm:$0xff]
  %v622 = vld [vmem:[%s2 + $0x8] sm:$0xff]
  %v623 = vld [vmem:[%s2 + $0x10] sm:$0xff]
  %v624 = vld [vmem:[%s2 + $0x18] sm:$0xff]
  %v626 = vsel %vm145, %v515, 0
  %v629 = vsel %vm145, %v530, 0
  %631 = vmatpush.msra.mxu0 0.0
  %632 = vmatpush.msra.mxu0 0.0
  %633 = vmatpush.msra.mxu0 0.0
  %634 = vmatpush.msra.mxu0 0.0
  %635 = vmatpush.msra.mxu0 0.0
  %636 = vmatpush.msra.mxu0 0.0
  %637 = vmatpush.msra.mxu0 0.0
  %638 = vmatpush.msra.mxu0 0.0
  %639 = vmatpush.msra.mxu0 0.0
  %640 = vmatpush.msra.mxu0 0.0
  %641 = vmatpush.msra.mxu0 0.0
  %642 = vmatpush.msra.mxu0 0.0
  %643 = vmatpush.msra.mxu0 0.0
  %644 = vmatpush.msra.mxu0 0.0
  %645 = vmatpush.msra.mxu0 0.0
  %646 = vmatpush.msra.mxu0 %v621
  %647 = vmatmul.f32.gmra.mxu0 %v626
  %v648 = vpop.f32.mrf.mxu0
  %v649 = vadd.f32 0.0, %v648
  %650 = vmatmul.f32.gmra.mxu0 %v629
  %v651 = vpop.f32.mrf.mxu0
  %v652 = vadd.f32 0.0, %v651
  %653 = vdwg.mxu0
  %v655 = vsel %vm145, %v545, 0
  %v658 = vsel %vm145, %v560, 0
  %660 = vmatpush.msra.mxu0 0.0
  %661 = vmatpush.msra.mxu0 0.0
  %662 = vmatpush.msra.mxu0 0.0
  %663 = vmatpush.msra.mxu0 0.0
  %664 = vmatpush.msra.mxu0 0.0
  %665 = vmatpush.msra.mxu0 0.0
  %666 = vmatpush.msra.mxu0 0.0
  %667 = vmatpush.msra.mxu0 0.0
  %668 = vmatpush.msra.mxu0 0.0
  %669 = vmatpush.msra.mxu0 0.0
  %670 = vmatpush.msra.mxu0 0.0
  %671 = vmatpush.msra.mxu0 0.0
  %672 = vmatpush.msra.mxu0 0.0
  %673 = vmatpush.msra.mxu0 0.0
  %674 = vmatpush.msra.mxu0 0.0
  %675 = vmatpush.msra.mxu0 %v622
  %676 = vmatmul.f32.gmra.mxu0 %v655
  %v677 = vpop.f32.mrf.mxu0
  %v678 = vadd.f32 0.0, %v677
  %679 = vmatmul.f32.gmra.mxu0 %v658
  %v680 = vpop.f32.mrf.mxu0
  %v681 = vadd.f32 0.0, %v680
  %682 = vdwg.mxu0
  %v684 = vsel %vm145, %v575, 0
  %v687 = vsel %vm145, %v590, 0
  %689 = vmatpush.msra.mxu0 0.0
  %690 = vmatpush.msra.mxu0 0.0
  %691 = vmatpush.msra.mxu0 0.0
  %692 = vmatpush.msra.mxu0 0.0
  %693 = vmatpush.msra.mxu0 0.0
  %694 = vmatpush.msra.mxu0 0.0
  %695 = vmatpush.msra.mxu0 0.0
  %696 = vmatpush.msra.mxu0 0.0
  %697 = vmatpush.msra.mxu0 0.0
  %698 = vmatpush.msra.mxu0 0.0
  %699 = vmatpush.msra.mxu0 0.0
  %700 = vmatpush.msra.mxu0 0.0
  %701 = vmatpush.msra.mxu0 0.0
  %702 = vmatpush.msra.mxu0 0.0
  %703 = vmatpush.msra.mxu0 0.0
  %704 = vmatpush.msra.mxu0 %v623
  %705 = vmatmul.f32.gmra.mxu0 %v684
  %v706 = vpop.f32.mrf.mxu0
  %v707 = vadd.f32 0.0, %v706
  %708 = vmatmul.f32.gmra.mxu0 %v687
  %v709 = vpop.f32.mrf.mxu0
  %v710 = vadd.f32 0.0, %v709
  %711 = vdwg.mxu0
  %v713 = vsel %vm145, %v605, 0
  %v716 = vsel %vm145, %v620, 0
  %718 = vmatpush.msra.mxu0 0.0
  %719 = vmatpush.msra.mxu0 0.0
  %720 = vmatpush.msra.mxu0 0.0
  %721 = vmatpush.msra.mxu0 0.0
  %722 = vmatpush.msra.mxu0 0.0
  %723 = vmatpush.msra.mxu0 0.0
  %724 = vmatpush.msra.mxu0 0.0
  %725 = vmatpush.msra.mxu0 0.0
  %726 = vmatpush.msra.mxu0 0.0
  %727 = vmatpush.msra.mxu0 0.0
  %728 = vmatpush.msra.mxu0 0.0
  %729 = vmatpush.msra.mxu0 0.0
  %730 = vmatpush.msra.mxu0 0.0
  %731 = vmatpush.msra.mxu0 0.0
  %732 = vmatpush.msra.mxu0 0.0
  %733 = vmatpush.msra.mxu0 %v624
  %734 = vmatmul.f32.gmra.mxu0 %v713
  %v735 = vpop.f32.mrf.mxu0
  %v736 = vadd.f32 0.0, %v735
  %737 = vmatmul.f32.gmra.mxu0 %v716
  %v738 = vpop.f32.mrf.mxu0
  %v739 = vadd.f32 0.0, %v738
  %740 = vdwg.mxu0
  %v741 = vsel %vm38, %v649, 0.0
  %v742 = vsel %vm38, %v678, 0.0
  %v743 = vadd.f32 %v741, %v742
  %v744 = vsel %vm38, %v707, 0.0
  %v745 = vadd.f32 %v743, %v744
  %v746 = vsel %vm38, %v736, 0.0
  %v747 = vadd.f32 %v745, %v746
  %v748 = vsel %vm38, %v652, 0.0
  %v749 = vsel %vm38, %v681, 0.0
  %v750 = vadd.f32 %v748, %v749
  %v751 = vsel %vm38, %v710, 0.0
  %v752 = vadd.f32 %v750, %v751
  %v753 = vsel %vm38, %v739, 0.0
  %v754 = vadd.f32 %v752, %v753
  %v755 = vld [vmem:[%s3] sm:$0x1]
  %v757 = vperm.slane %v755, 0
  %v759 = vadd.f32 %v747, %v757
  %v760 = vadd.f32 %v754, %v757
  %v762 = vrot.slane %v759, 4
  %763 = vrot.lane.b32.xlu0 %v762, 32
  %v764 = vpop.permute.xlu0 %763
  %767 = vrot.lane.b32.xlu0 %v760, 64
  %v768 = vpop.permute.xlu0 %767
  %v770 = vrot.slane %v760, 4
  %771 = vrot.lane.b32.xlu0 %v770, 96
  %v772 = vpop.permute.xlu0 %771
  %v774 = vsel %vm38, %v759, %v764
  %vm775 = vcmask 523264
  %v776 = vsel %vm775, %v774, %v768
  %vm777 = vcmask 785408
  %v778 = vsel %vm777, %v776, %v772
  %779 = vst [vmem:[%s5] sm:$0xf] %v778
  // Predicated region
  $region22: #{multi_head_attention.1} parent=0 // pred_check
    _
  $region23: #{multi_head_attention.1} parent=0 // pred_check_branch
    %781 = sbr.rel (0) target = $region25
  $region24: #{multi_head_attention.1} parent=0 // pred_region
    _
  $region25: #{multi_head_attention.1} parent=0 // pred_fallthru
    _
  // Predicated region
  $region26: #{multi_head_attention.1} parent=0 // pred_check
    _
  $region27: #{multi_head_attention.1} parent=0 // pred_check_branch
    %783 = sbr.rel (0) target = $region29
  $region28: #{multi_head_attention.1} parent=0 // pred_region
    _
  $region29: #{multi_head_attention.1} parent=0 // pred_fallthru
    _

</llo_original>
